<compile_context>
chip_gen: v6e
topology: v6e:2x2x1
jax: 0.10.0
libtpu: 0.0.40
codegen_flags: <defaults>
</compile_context>

<pallas_src>
import jax
import jax.numpy as jnp
from jax.experimental import pallas as pl
from jax.experimental.pallas import tpu as pltpu


def linear_kernel(x_ref, w_ref, b_ref, o_ref):
    # One MXU matmul per (TM, K_pad) x-tile against the resident (K_pad, N)
    # weight, f32 accumulation, broadcast bias add, single store.
    acc = jnp.dot(x_ref[...], w_ref[...], preferred_element_type=jnp.float32)
    o_ref[...] = (acc + b_ref[...]).astype(o_ref.dtype)


def _round_up(v, m):
    return ((v + m - 1) // m) * m


def neural_network_forward(x, weight_t, bias, *, block_rows=4096):
    """x: (B, K) f32, weight_t: (K, N) f32, bias: (1, N) f32 -> (B, N) f32."""
    B, K = x.shape
    Kw, N = weight_t.shape
    assert K == Kw and bias.shape == (1, N)

    # Lane-align the contraction dim: 300 -> 384 (multiple of 128).
    K_pad = _round_up(K, 128)
    # Batch tile: multiple of 8 sublanes, capped by block_rows.
    TM = min(_round_up(B, 8), _round_up(block_rows, 8))
    B_pad = _round_up(B, TM)

    # Zero-pad BOTH x's K dim and weight_t's K dim (padding only one side
    # would corrupt the dot). Padded batch rows are sliced off at the end.
    if B_pad != B or K_pad != K:
        x_p = jnp.pad(x, ((0, B_pad - B), (0, K_pad - K)))
    else:
        x_p = x
    w_p = jnp.pad(weight_t, ((0, K_pad - K), (0, 0))) if K_pad != K else weight_t

    grid = (B_pad // TM,)

    out = pl.pallas_call(
        linear_kernel,
        out_shape=jax.ShapeDtypeStruct((B_pad, N), x.dtype),
        grid=grid,
        in_specs=[
            # x: tiled over batch, double-buffered by the pipeline.
            pl.BlockSpec((TM, K_pad), lambda i: (i, 0)),
            # weight / bias: constant index_map -> fetched once, VMEM-resident.
            pl.BlockSpec((K_pad, N), lambda i: (0, 0)),
            pl.BlockSpec((1, N), lambda i: (0, 0)),
        ],
        out_specs=pl.BlockSpec((TM, N), lambda i: (i, 0)),
        compiler_params=pltpu.CompilerParams(
            # Batch is independent across tiles -> parallel (megacore / 2-TC).
            dimension_semantics=("parallel",),
            # Headroom-aware limit that still fits v7x's 64 MiB VMEM.
            vmem_limit_bytes=48 << 20,
        ),
        cost_estimate=pl.CostEstimate(
            flops=2 * B_pad * K_pad * N,
            transcendentals=0,
            bytes_accessed=4 * (B_pad * K_pad + K_pad * N + N + B_pad * N),
        ),
    )(x_p, w_p, bias)

    return out[:B] if B_pad != B else out


if __name__ == "__main__":
    key = jax.random.PRNGKey(0)
    k_x, k_w, k_b = jax.random.split(key, 3)

    batch = 8
    in_features = 300
    out_features = 4

    # Deterministic init mimicking nn.Linear's uniform(-1/sqrt(fan_in), 1/sqrt(fan_in)).
    bound = 1.0 / jnp.sqrt(jnp.float32(in_features))
    # PyTorch weight is (out, in); kernel consumes its transpose (in, out).
    weight = jax.random.uniform(
        k_w, (out_features, in_features), jnp.float32, -bound, bound
    )
    bias = jax.random.uniform(k_b, (out_features,), jnp.float32, -bound, bound)
    weight_t = weight.T                      # (300, 4)
    bias_2d = bias.reshape(1, out_features)  # (1, 4)

    x = jax.random.normal(k_x, (batch, in_features), jnp.float32)

    out = neural_network_forward(x, weight_t, bias_2d)
    out = jax.block_until_ready(out)

    # Correctness check vs plain JAX reference (same as torch logits = x @ W.T + b).
    ref = x @ weight_t + bias_2d
    assert out.shape == (batch, out_features)
    assert jnp.allclose(out, ref, atol=1e-5, rtol=1e-5)

    print("KERNEL_OK")
</pallas_src>

<mosaic_0001>
module attributes {stable_mosaic.version = 11 : i64} {
  func.func @linear_kernel(%arg0: i32, %arg1: memref<8x384xf32, #tpu.memory_space<vmem>>, %arg2: memref<384x4xf32, #tpu.memory_space<vmem>>, %arg3: memref<1x4xf32, #tpu.memory_space<vmem>>, %arg4: memref<8x4xf32, #tpu.memory_space<vmem>>) attributes {dimension_semantics = [#tpu.dimension_semantics<parallel>], iteration_bounds = array<i64: 1>, scalar_prefetch = 0 : i64, scratch_operands = 0 : i64, tpu.core_type = #tpu.core_type<tc>, window_params = [{transform_indices = @transform_0, window_bounds = array<i64: 8, 384>}, {pipeline_mode = #tpu.pipeline_mode<synchronous>, transform_indices = @transform_1, window_bounds = array<i64: 384, 4>}, {pipeline_mode = #tpu.pipeline_mode<synchronous>, transform_indices = @transform_2, window_bounds = array<i64: 1, 4>}, {transform_indices = @transform_3, window_bounds = array<i64: 8, 4>}]} {
    %c0 = arith.constant 0 : index
    %c0_0 = arith.constant 0 : index
    %0 = vector.load %arg1[%c0, %c0_0] : memref<8x384xf32, #tpu.memory_space<vmem>>, vector<8x384xf32>
    %c0_1 = arith.constant 0 : index
    %c0_2 = arith.constant 0 : index
    %1 = vector.load %arg2[%c0_1, %c0_2] : memref<384x4xf32, #tpu.memory_space<vmem>>, vector<384x4xf32>
    %cst = arith.constant dense<0.000000e+00> : vector<8x4xf32>
    %2 = tpu.matmul %0, %1, %cst {dimension_numbers = #tpu.dot_dimension_numbers<[1], [0], [0], [1], [0, 0, 1, 1], [], []>} : vector<8x384xf32>, vector<384x4xf32>, vector<8x4xf32> -> vector<8x4xf32>
    %c0_3 = arith.constant 0 : index
    %c0_4 = arith.constant 0 : index
    %3 = vector.load %arg3[%c0_3, %c0_4] : memref<1x4xf32, #tpu.memory_space<vmem>>, vector<1x4xf32>
    %4 = vector.broadcast %3 : vector<1x4xf32> to vector<8x4xf32>
    %5 = arith.addf %2, %4 : vector<8x4xf32>
    %c0_5 = arith.constant 0 : index
    %c0_6 = arith.constant 0 : index
    %6 = vector.load %arg4[%c0_5, %c0_6] : memref<8x4xf32, #tpu.memory_space<vmem>>, vector<8x4xf32>
    tpu.vector_store %arg4[%c0_5, %c0_6], %5 {strides = array<i32>} : memref<8x4xf32, #tpu.memory_space<vmem>>, vector<8x4xf32>,
    return
  }
  func.func @transform_0(%arg0: i32) -> (i32, i32) {
    %c0_i32 = arith.constant 0 : i32
    %c0_i32_0 = arith.constant 0 : i32
    return %arg0, %c0_i32 : i32, i32
  }
  func.func @transform_1(%arg0: i32) -> (i32, i32) {
    %c0_i32 = arith.constant 0 : i32
    %c0_i32_0 = arith.constant 0 : i32
    %c0_i32_1 = arith.constant 0 : i32
    return %c0_i32, %c0_i32_0 : i32, i32
  }
  func.func @transform_2(%arg0: i32) -> (i32, i32) {
    %c0_i32 = arith.constant 0 : i32
    %c0_i32_0 = arith.constant 0 : i32
    %c0_i32_1 = arith.constant 0 : i32
    return %c0_i32, %c0_i32_0 : i32, i32
  }
  func.func @transform_3(%arg0: i32) -> (i32, i32) {
    %c0_i32 = arith.constant 0 : i32
    %c0_i32_0 = arith.constant 0 : i32
    return %arg0, %c0_i32 : i32, i32
  }
}

</mosaic_0001>

<llo_original>
// kernel: tpu_custom_call.1
$region0: #{tpu_custom_call.1}
  #allocation0 [shape = 'u32[]', space=smem, size = 0x4, offset = 0x4, fixed_abs, tag = 'smem constant byte address 0x4 - core index']
  #allocation1 [shape = 'u32[144,128]{1,0:T(1,128)}', space=vmem, size = 0x12000, scoped, tag = 'internal scratch']
  %s0 = inlined_call_operand.vmem [shape: f32[8,384], index: 0, kind: input, shape index: {}]
  %s1 = inlined_call_operand.vmem [shape: f32[384,4], index: 1, kind: input, shape index: {}]
  %s2 = inlined_call_operand.vmem [shape: f32[1,4], index: 2, kind: input, shape index: {}]
  %s3 = inlined_call_operand.vmem [shape: f32[8,4], index: 3, kind: output, shape index: {}]
  %s4 = sld [smem:[#allocation0]]
  $region22: #{tpu_custom_call.1} parent=0
    _
  %s6 = ssub.s32 1, %s4
  %s7 = scalar_select 0, %s6, %s4
  // Predicated region
  $region2: #{tpu_custom_call.1} parent=0 // pred_check
    _
  $region3: #{tpu_custom_call.1} parent=0 // pred_check_branch
    %9 = sbr.rel (0) target = $region5
  $region4: #{tpu_custom_call.1} parent=0 // pred_region
    _
  $region5: #{tpu_custom_call.1} parent=0 // pred_fallthru
    _
  // Predicated region
  $region6: #{tpu_custom_call.1} parent=0 // pred_check
    _
  $region7: #{tpu_custom_call.1} parent=0 // pred_check_branch
    %11 = sbr.rel (0) target = $region9
  $region8: #{tpu_custom_call.1} parent=0 // pred_region
    _
  $region9: #{tpu_custom_call.1} parent=0 // pred_fallthru
    _
  // Predicated region
  $region10: #{tpu_custom_call.1} parent=0 // pred_check
    _
  $region11: #{tpu_custom_call.1} parent=0 // pred_check_branch
    %13 = sbr.rel (0) target = $region13
  $region12: #{tpu_custom_call.1} parent=0 // pred_region
    _
  $region13: #{tpu_custom_call.1} parent=0 // pred_fallthru
    _
  %v14 = vld [vmem:[%s0] sm:$0xff]
  %v15 = vld [vmem:[%s0 + $0x8] sm:$0xff]
  %v16 = vld [vmem:[%s0 + $0x10] sm:$0xff]
  %v17 = vld [vmem:[%s1] sm:$0xff]
  %v18 = vld [vmem:[%s1 + $0x8] sm:$0xff]
  %v19 = vld [vmem:[%s1 + $0x10] sm:$0xff]
  %v20 = vld [vmem:[%s1 + $0x18] sm:$0xff]
  %v21 = vld [vmem:[%s1 + $0x20] sm:$0xff]
  %v22 = vld [vmem:[%s1 + $0x28] sm:$0xff]
  %v23 = vld [vmem:[%s1 + $0x30] sm:$0xff]
  %v24 = vld [vmem:[%s1 + $0x38] sm:$0xff]
  %v25 = vld [vmem:[%s1 + $0x40] sm:$0xff]
  %v26 = vld [vmem:[%s1 + $0x48] sm:$0xff]
  %v27 = vld [vmem:[%s1 + $0x50] sm:$0xff]
  %v28 = vld [vmem:[%s1 + $0x58] sm:$0xff]
  %v29 = vld [vmem:[%s1 + $0x60] sm:$0xff]
  %v30 = vld [vmem:[%s1 + $0x68] sm:$0xff]
  %v31 = vld [vmem:[%s1 + $0x70] sm:$0xff]
  %v32 = vld [vmem:[%s1 + $0x78] sm:$0xff]
  %v33 = vld [vmem:[%s1 + $0x80] sm:$0xff]
  %v34 = vld [vmem:[%s1 + $0x88] sm:$0xff]
  %v35 = vld [vmem:[%s1 + $0x90] sm:$0xff]
  %v36 = vld [vmem:[%s1 + $0x98] sm:$0xff]
  %v37 = vld [vmem:[%s1 + $0xa0] sm:$0xff]
  %v38 = vld [vmem:[%s1 + $0xa8] sm:$0xff]
  %v39 = vld [vmem:[%s1 + $0xb0] sm:$0xff]
  %v40 = vld [vmem:[%s1 + $0xb8] sm:$0xff]
  %v41 = vld [vmem:[%s1 + $0xc0] sm:$0xff]
  %v42 = vld [vmem:[%s1 + $0xc8] sm:$0xff]
  %v43 = vld [vmem:[%s1 + $0xd0] sm:$0xff]
  %v44 = vld [vmem:[%s1 + $0xd8] sm:$0xff]
  %v45 = vld [vmem:[%s1 + $0xe0] sm:$0xff]
  %v46 = vld [vmem:[%s1 + $0xe8] sm:$0xff]
  %v47 = vld [vmem:[%s1 + $0xf0] sm:$0xff]
  %v48 = vld [vmem:[%s1 + $0xf8] sm:$0xff]
  %v49 = vld [vmem:[%s1 + $0x100] sm:$0xff]
  %v50 = vld [vmem:[%s1 + $0x108] sm:$0xff]
  %v51 = vld [vmem:[%s1 + $0x110] sm:$0xff]
  %v52 = vld [vmem:[%s1 + $0x118] sm:$0xff]
  %v53 = vld [vmem:[%s1 + $0x120] sm:$0xff]
  %v54 = vld [vmem:[%s1 + $0x128] sm:$0xff]
  %v55 = vld [vmem:[%s1 + $0x130] sm:$0xff]
  %v56 = vld [vmem:[%s1 + $0x138] sm:$0xff]
  %v57 = vld [vmem:[%s1 + $0x140] sm:$0xff]
  %v58 = vld [vmem:[%s1 + $0x148] sm:$0xff]
  %v59 = vld [vmem:[%s1 + $0x150] sm:$0xff]
  %v60 = vld [vmem:[%s1 + $0x158] sm:$0xff]
  %v61 = vld [vmem:[%s1 + $0x160] sm:$0xff]
  %v62 = vld [vmem:[%s1 + $0x168] sm:$0xff]
  %v63 = vld [vmem:[%s1 + $0x170] sm:$0xff]
  %v64 = vld [vmem:[%s1 + $0x178] sm:$0xff]
  %v65 = vld [vmem:[%s2] sm:$0x1]
  %v67 = vlaneseq
  %v68 = vshrl.u32 %v67, 7
  %v69 = vsub.s32 0, %v68
  %v70 = vrot.slane %v65, %v69
  %72 = vmatprep.subr.mxu0 0.0
  %73 = vmatpush1.msra.mxu0 %v32
  %74 = vmatprep.subr.mxu0 0.0
  %75 = vmatpush1.msra.mxu0 %v31
  %76 = vmatprep.subr.mxu0 0.0
  %77 = vmatpush1.msra.mxu0 %v30
  %78 = vmatprep.subr.mxu0 0.0
  %79 = vmatpush1.msra.mxu0 %v29
  %80 = vmatprep.subr.mxu0 0.0
  %81 = vmatpush1.msra.mxu0 %v28
  %82 = vmatprep.subr.mxu0 0.0
  %83 = vmatpush1.msra.mxu0 %v27
  %84 = vmatprep.subr.mxu0 0.0
  %85 = vmatpush1.msra.mxu0 %v26
  %86 = vmatprep.subr.mxu0 0.0
  %87 = vmatpush1.msra.mxu0 %v25
  %88 = vmatprep.subr.mxu0 0.0
  %89 = vmatpush1.msra.mxu0 %v24
  %90 = vmatprep.subr.mxu0 0.0
  %91 = vmatpush1.msra.mxu0 %v23
  %92 = vmatprep.subr.mxu0 0.0
  %93 = vmatpush1.msra.mxu0 %v22
  %94 = vmatprep.subr.mxu0 0.0
  %95 = vmatpush1.msra.mxu0 %v21
  %96 = vmatprep.subr.mxu0 0.0
  %97 = vmatpush1.msra.mxu0 %v20
  %98 = vmatprep.subr.mxu0 0.0
  %99 = vmatpush1.msra.mxu0 %v19
  %100 = vmatprep.subr.mxu0 0.0
  %101 = vmatpush1.msra.mxu0 %v18
  %102 = vmatprep.subr.mxu0 0.0
  %103 = vmatpush1.msra.mxu0 %v17
  %104 = vmatprep.subr.mxu0 0.0
  %105 = vmatpush2.msra.mxu0 %v48
  %106 = vmatprep.subr.mxu0 0.0
  %107 = vmatpush2.msra.mxu0 %v47
  %108 = vmatprep.subr.mxu0 0.0
  %109 = vmatpush2.msra.mxu0 %v46
  %110 = vmatprep.subr.mxu0 0.0
  %111 = vmatpush2.msra.mxu0 %v45
  %112 = vmatprep.subr.mxu0 0.0
  %113 = vmatpush2.msra.mxu0 %v44
  %114 = vmatprep.subr.mxu0 0.0
  %115 = vmatpush2.msra.mxu0 %v43
  %116 = vmatprep.subr.mxu0 0.0
  %117 = vmatpush2.msra.mxu0 %v42
  %118 = vmatprep.subr.mxu0 0.0
  %119 = vmatpush2.msra.mxu0 %v41
  %120 = vmatprep.subr.mxu0 0.0
  %121 = vmatpush2.msra.mxu0 %v40
  %122 = vmatprep.subr.mxu0 0.0
  %123 = vmatpush2.msra.mxu0 %v39
  %124 = vmatprep.subr.mxu0 0.0
  %125 = vmatpush2.msra.mxu0 %v38
  %126 = vmatprep.subr.mxu0 0.0
  %127 = vmatpush2.msra.mxu0 %v37
  %128 = vmatprep.subr.mxu0 0.0
  %129 = vmatpush2.msra.mxu0 %v36
  %130 = vmatprep.subr.mxu0 0.0
  %131 = vmatpush2.msra.mxu0 %v35
  %132 = vmatprep.subr.mxu0 0.0
  %133 = vmatpush2.msra.mxu0 %v34
  %134 = vmatprep.subr.mxu0 0.0
  %135 = vmatpush2.msra.mxu0 %v33
  %136 = vmatprep.mubr.f32.mxu0 %v15
  %137 = vmatmul.mubr.f32.gmra.mxu0 %v14
  %v138 = vpop.f32.mrf.mxu0
  %v139 = vadd.f32 %v70, %v138
  %v140 = vpop.f32.mrf.mxu0
  %141 = vdwg.mxu0
  %142 = vmatprep.subr.mxu0 0.0
  %143 = vmatpush1.msra.mxu0 %v64
  %144 = vmatprep.subr.mxu0 0.0
  %145 = vmatpush1.msra.mxu0 %v63
  %146 = vmatprep.subr.mxu0 0.0
  %147 = vmatpush1.msra.mxu0 %v62
  %148 = vmatprep.subr.mxu0 0.0
  %149 = vmatpush1.msra.mxu0 %v61
  %150 = vmatprep.subr.mxu0 0.0
  %151 = vmatpush1.msra.mxu0 %v60
  %152 = vmatprep.subr.mxu0 0.0
  %153 = vmatpush1.msra.mxu0 %v59
  %154 = vmatprep.subr.mxu0 0.0
  %155 = vmatpush1.msra.mxu0 %v58
  %156 = vmatprep.subr.mxu0 0.0
  %157 = vmatpush1.msra.mxu0 %v57
  %158 = vmatprep.subr.mxu0 0.0
  %159 = vmatpush1.msra.mxu0 %v56
  %160 = vmatprep.subr.mxu0 0.0
  %161 = vmatpush1.msra.mxu0 %v55
  %162 = vmatprep.subr.mxu0 0.0
  %163 = vmatpush1.msra.mxu0 %v54
  %164 = vmatprep.subr.mxu0 0.0
  %165 = vmatpush1.msra.mxu0 %v53
  %166 = vmatprep.subr.mxu0 0.0
  %167 = vmatpush1.msra.mxu0 %v52
  %168 = vmatprep.subr.mxu0 0.0
  %169 = vmatpush1.msra.mxu0 %v51
  %170 = vmatprep.subr.mxu0 0.0
  %171 = vmatpush1.msra.mxu0 %v50
  %172 = vmatprep.subr.mxu0 0.0
  %173 = vmatpush1.msra.mxu0 %v49
  %174 = vmatprep.subr.mxu0 0.0
  %175 = vmatpush2.msra.mxu0 0.0
  %176 = vmatprep.subr.mxu0 0.0
  %177 = vmatpush2.msra.mxu0 0.0
  %178 = vmatprep.subr.mxu0 0.0
  %179 = vmatpush2.msra.mxu0 0.0
  %180 = vmatprep.subr.mxu0 0.0
  %181 = vmatpush2.msra.mxu0 0.0
  %182 = vmatprep.subr.mxu0 0.0
  %183 = vmatpush2.msra.mxu0 0.0
  %184 = vmatprep.subr.mxu0 0.0
  %185 = vmatpush2.msra.mxu0 0.0
  %186 = vmatprep.subr.mxu0 0.0
  %187 = vmatpush2.msra.mxu0 0.0
  %188 = vmatprep.subr.mxu0 0.0
  %189 = vmatpush2.msra.mxu0 0.0
  %190 = vmatprep.subr.mxu0 0.0
  %191 = vmatpush2.msra.mxu0 0.0
  %192 = vmatprep.subr.mxu0 0.0
  %193 = vmatpush2.msra.mxu0 0.0
  %194 = vmatprep.subr.mxu0 0.0
  %195 = vmatpush2.msra.mxu0 0.0
  %196 = vmatprep.subr.mxu0 0.0
  %197 = vmatpush2.msra.mxu0 0.0
  %198 = vmatprep.subr.mxu0 0.0
  %199 = vmatpush2.msra.mxu0 0.0
  %200 = vmatprep.subr.mxu0 0.0
  %201 = vmatpush2.msra.mxu0 0.0
  %202 = vmatprep.subr.mxu0 0.0
  %203 = vmatpush2.msra.mxu0 0.0
  %204 = vmatprep.subr.mxu0 0.0
  %205 = vmatpush2.msra.mxu0 0.0
  %206 = vmatprep.mubr.f32.mxu0 0.0
  %207 = vmatmul.mubr.f32.gmra.mxu0 %v16
  %v208 = vpop.f32.mrf.mxu0
  %v209 = vadd.f32 %v139, %v208
  %v210 = vpop.f32.mrf.mxu0
  %211 = vdwg.mxu0
  %vm212 = vcmask 31744
  %213 = vst.msk [vmem:[%s3] sm:$0xff] %vm212, %v209
  // Predicated region
  $region14: #{tpu_custom_call.1} parent=0 // pred_check
    _
  $region15: #{tpu_custom_call.1} parent=0 // pred_check_branch
    %215 = sbr.rel (0) target = $region17
  $region16: #{tpu_custom_call.1} parent=0 // pred_region
    _
  $region17: #{tpu_custom_call.1} parent=0 // pred_fallthru
    _
  // Predicated region
  $region18: #{tpu_custom_call.1} parent=0 // pred_check
    _
  $region19: #{tpu_custom_call.1} parent=0 // pred_check_branch
    %217 = sbr.rel (0) target = $region21
  $region20: #{tpu_custom_call.1} parent=0 // pred_region
    _
  $region21: #{tpu_custom_call.1} parent=0 // pred_fallthru
    _

</llo_original>
